<compile_context>
chip_gen: v6e
topology: v6e:2x2x1
jax: 0.10.0
libtpu: 0.0.40
codegen_flags: <defaults>
</compile_context>

<pallas_src>
import functools

import jax
import jax.numpy as jnp
from jax.experimental import pallas as pl
from jax.experimental.pallas import tpu as pltpu


def _emb_size_reduction_kernel(x_ref, wt_ref, o_ref, *, dim, groups):
    x = x_ref[...]                                    # [TB, P], native dtype

    # --- folded L2 norm: keep only the per-row scale (transient f32 cast) ---
    xf = x.astype(jnp.float32)
    inv_norm = jax.lax.rsqrt(jnp.sum(xf * xf, axis=-1, keepdims=True) + 1e-12)  # [TB, 1]

    # --- reduction_coeff: Linear(pre_dim -> G, no bias) + Softmax(dim=-1) ---
    # Weight arrives pre-transposed ([P, G]) and in x.dtype: native-orientation
    # MXU contraction, no in-kernel transpose, no silent f32-operand promotion.
    raw = jnp.dot(x, wt_ref[...], preferred_element_type=jnp.float32)    # [TB, G]
    logits = raw * inv_norm                                              # == l2_norm(x) @ W.T
    m = jnp.max(logits, axis=-1, keepdims=True)
    e = jnp.exp(logits - m)
    a = e / jnp.sum(e, axis=-1, keepdims=True)        # exact softmax (rows sum to 1)

    # --- grouped weighted sum on the VPU: G lane-aligned chunks, short unrolled
    # FMA chain (G is only 4..16), accumulated in f32. Replaces the old masked
    # a@R / (x*a_rep)@S matmuls entirely.
    acc = a[:, 0:1] * x[:, 0:dim].astype(jnp.float32)
    for g in range(1, groups):
        acc = acc + a[:, g:g + 1] * x[:, g * dim:(g + 1) * dim].astype(jnp.float32)

    o_ref[...] = (acc * inv_norm).astype(o_ref.dtype)


def _pick_batch_tile(batch, max_tb=512):
    # Small batches: a single grid step (splitting tiny batches across v7x's
    # two TensorCores loses to per-step overhead + MXU row underfill).
    # Large batches: 512-row tiles (multiple of 128/256 -> full MXU passes);
    # >=2 grid steps are then sharded across v7x cores via "parallel".
    # TODO(synk): on single-TC v5e/v6e a caller may raise max_batch_tile to 1024.
    if batch <= max_tb:
        return -(-batch // 8) * 8            # one grid step, sublane-aligned
    return max_tb


def emb_size_reduction(x, w, *, dim, max_batch_tile=512):
    """x: [B, pre_dim]; w: [G, pre_dim] (torch Linear layout), G = pre_dim // dim."""
    B, pre_dim = x.shape
    G = pre_dim // dim
    assert G * dim == pre_dim
    assert w.shape == (G, pre_dim)
    # dim should be a multiple of 128 (true for the module's configs: dim=512
    # default, dim=128 in the demo) so per-group x slices are lane-aligned and
    # the output block is lane-dense; smaller dims still work but hit masked
    # sub-128-lane stores.

    # Pre-transposed weight, cast to x.dtype so both matmul operands match
    # (bf16 callers get the fast MXU path; constant block is also half the bytes).
    wt = jnp.asarray(w).T.astype(x.dtype)                                 # [P, G]

    tb = _pick_batch_tile(B, max_batch_tile)
    b_pad = -(-B // tb) * tb
    if b_pad != B:
        # Zero pad rows; the eps in the norm keeps them finite, result is sliced off.
        x = jnp.pad(x, ((0, b_pad - B), (0, 0)))
    grid = (b_pad // tb,)

    kernel = functools.partial(_emb_size_reduction_kernel, dim=dim, groups=G)
    out = pl.pallas_call(
        kernel,
        out_shape=jax.ShapeDtypeStruct((b_pad, dim), x.dtype),
        grid_spec=pltpu.PrefetchScalarGridSpec(
            num_scalar_prefetch=0,
            grid=grid,
            in_specs=[
                pl.BlockSpec((tb, pre_dim), lambda i: (i, 0)),    # x tile (batch-parallel)
                # Constant-index weight block (<~1 MiB now that R/S are gone);
                # Pallas skips the re-DMA when the block index is unchanged
                # between consecutive grid steps, so double-buffering it costs
                # only negligible VMEM.
                pl.BlockSpec((pre_dim, G), lambda i: (0, 0)),     # W.T
            ],
            out_specs=pl.BlockSpec((tb, dim), lambda i: (i, 0)),  # lane-dense for dim >= 128
        ),
        compiler_params=pltpu.CompilerParams(
            dimension_semantics=("parallel",),
            # Worst case (tb=512, pre_dim=2048, f32): double-buffered x (8 MiB)
            # + out (2 MiB) + W.T (<2 MiB) + small intermediates ~= 12-14 MiB;
            # 32 MiB leaves ample headroom on v5e/v6e/v7x alike.
            vmem_limit_bytes=32 * 1024 * 1024,
        ),
    )(x, wt)
    return out[:B]


def _reference(x, w, dim):
    # Pure-JAX reference matching the PyTorch forward exactly.
    xn = x / jnp.linalg.norm(x, axis=-1, keepdims=True)
    a = jax.nn.softmax(xn @ w.T, axis=-1)
    B, P = x.shape
    G = P // dim
    return jnp.sum(xn.reshape(B, G, dim) * a[..., None], axis=1)


if __name__ == "__main__":
    # Small shapes consistent with the module (embedding_size=128, heads=4):
    #   pre_dim = 512, dim = 128 -> G = 4 groups; output lane-dense (dim = 128).
    # B = 16 -> single 16-row tile, grid = 1 (no underfilled split for tiny batches).
    B, pre_dim, dim = 16, 512, 128
    G = pre_dim // dim

    key = jax.random.PRNGKey(0)
    kx, kw = jax.random.split(key)
    x = jax.random.normal(kx, (B, pre_dim), dtype=jnp.float32)
    # Deterministic Linear weight (torch layout: [out, in] = [G, pre_dim]).
    bound = 1.0 / (pre_dim ** 0.5)
    w = jax.random.uniform(kw, (G, pre_dim), dtype=jnp.float32,
                           minval=-bound, maxval=bound)

    out = emb_size_reduction(x, w, dim=dim)
    out = jax.block_until_ready(out)

    ref = _reference(x, w, dim)
    assert out.shape == (B, dim)
    assert jnp.allclose(out, ref, atol=1e-3, rtol=1e-2), "mismatch vs reference"
    print("KERNEL_OK")
</pallas_src>

<mosaic_0001>
module attributes {stable_mosaic.version = 11 : i64} {
  func.func @_emb_size_reduction_kernel(%arg0: i32, %arg1: memref<16x512xf32, #tpu.memory_space<vmem>>, %arg2: memref<512x4xf32, #tpu.memory_space<vmem>>, %arg3: memref<16x128xf32, #tpu.memory_space<vmem>>) attributes {dimension_semantics = [#tpu.dimension_semantics<parallel>], iteration_bounds = array<i64: 1>, scalar_prefetch = 0 : i64, scratch_operands = 0 : i64, tpu.core_type = #tpu.core_type<tc>, window_params = [{transform_indices = @transform_0, window_bounds = array<i64: 16, 512>}, {pipeline_mode = #tpu.pipeline_mode<synchronous>, transform_indices = @transform_1, window_bounds = array<i64: 512, 4>}, {transform_indices = @transform_2, window_bounds = array<i64: 16, 128>}]} {
    %c0 = arith.constant 0 : index
    %c0_0 = arith.constant 0 : index
    %0 = vector.load %arg1[%c0, %c0_0] : memref<16x512xf32, #tpu.memory_space<vmem>>, vector<16x512xf32>
    %1 = arith.mulf %0, %0 : vector<16x512xf32>
    %cst = arith.constant dense<0.000000e+00> : vector<16xf32>
    %2 = vector.multi_reduction <add>, %1, %cst [1] : vector<16x512xf32> to vector<16xf32>
    %3 = vector.shape_cast %2 : vector<16xf32> to vector<16x1xf32>
    %cst_1 = arith.constant 9.99999996E-13 : f32
    %4 = vector.broadcast %cst_1 : f32 to vector<16x1xf32>
    %5 = arith.addf %3, %4 : vector<16x1xf32>
    %6 = math.rsqrt %5 : vector<16x1xf32>
    %c0_2 = arith.constant 0 : index
    %c0_3 = arith.constant 0 : index
    %7 = vector.load %arg2[%c0_2, %c0_3] : memref<512x4xf32, #tpu.memory_space<vmem>>, vector<512x4xf32>
    %cst_4 = arith.constant dense<0.000000e+00> : vector<16x4xf32>
    %8 = tpu.matmul %0, %7, %cst_4 {dimension_numbers = #tpu.dot_dimension_numbers<[1], [0], [0], [1], [0, 0, 1, 1], [], []>} : vector<16x512xf32>, vector<512x4xf32>, vector<16x4xf32> -> vector<16x4xf32>
    %9 = vector.broadcast %6 : vector<16x1xf32> to vector<16x4xf32>
    %10 = arith.mulf %8, %9 : vector<16x4xf32>
    %cst_5 = arith.constant dense<0xFF800000> : vector<16xf32>
    %11 = vector.multi_reduction <maximumf>, %10, %cst_5 [1] : vector<16x4xf32> to vector<16xf32>
    %12 = vector.shape_cast %11 : vector<16xf32> to vector<16x1xf32>
    %13 = vector.broadcast %12 : vector<16x1xf32> to vector<16x4xf32>
    %14 = arith.subf %10, %13 : vector<16x4xf32>
    %15 = math.exp %14 : vector<16x4xf32>
    %cst_6 = arith.constant dense<0.000000e+00> : vector<16xf32>
    %16 = vector.multi_reduction <add>, %15, %cst_6 [1] : vector<16x4xf32> to vector<16xf32>
    %17 = vector.shape_cast %16 : vector<16xf32> to vector<16x1xf32>
    %18 = vector.broadcast %17 : vector<16x1xf32> to vector<16x4xf32>
    %19 = arith.divf %15, %18 : vector<16x4xf32>
    %20 = vector.extract_strided_slice %19 {offsets = [0, 0], sizes = [16, 1], strides = [1, 1]} : vector<16x4xf32> to vector<16x1xf32>
    %21 = vector.extract_strided_slice %0 {offsets = [0, 0], sizes = [16, 128], strides = [1, 1]} : vector<16x512xf32> to vector<16x128xf32>
    %22 = vector.broadcast %20 : vector<16x1xf32> to vector<16x128xf32>
    %23 = arith.mulf %22, %21 : vector<16x128xf32>
    %24 = vector.extract_strided_slice %19 {offsets = [0, 1], sizes = [16, 1], strides = [1, 1]} : vector<16x4xf32> to vector<16x1xf32>
    %25 = vector.extract_strided_slice %0 {offsets = [0, 128], sizes = [16, 128], strides = [1, 1]} : vector<16x512xf32> to vector<16x128xf32>
    %26 = vector.broadcast %24 : vector<16x1xf32> to vector<16x128xf32>
    %27 = arith.mulf %26, %25 : vector<16x128xf32>
    %28 = arith.addf %23, %27 : vector<16x128xf32>
    %29 = vector.extract_strided_slice %19 {offsets = [0, 2], sizes = [16, 1], strides = [1, 1]} : vector<16x4xf32> to vector<16x1xf32>
    %30 = vector.extract_strided_slice %0 {offsets = [0, 256], sizes = [16, 128], strides = [1, 1]} : vector<16x512xf32> to vector<16x128xf32>
    %31 = vector.broadcast %29 : vector<16x1xf32> to vector<16x128xf32>
    %32 = arith.mulf %31, %30 : vector<16x128xf32>
    %33 = arith.addf %28, %32 : vector<16x128xf32>
    %34 = vector.extract_strided_slice %19 {offsets = [0, 3], sizes = [16, 1], strides = [1, 1]} : vector<16x4xf32> to vector<16x1xf32>
    %35 = vector.extract_strided_slice %0 {offsets = [0, 384], sizes = [16, 128], strides = [1, 1]} : vector<16x512xf32> to vector<16x128xf32>
    %36 = vector.broadcast %34 : vector<16x1xf32> to vector<16x128xf32>
    %37 = arith.mulf %36, %35 : vector<16x128xf32>
    %38 = arith.addf %33, %37 : vector<16x128xf32>
    %39 = vector.broadcast %6 : vector<16x1xf32> to vector<16x128xf32>
    %40 = arith.mulf %38, %39 : vector<16x128xf32>
    %c0_7 = arith.constant 0 : index
    %c0_8 = arith.constant 0 : index
    %41 = vector.load %arg3[%c0_7, %c0_8] : memref<16x128xf32, #tpu.memory_space<vmem>>, vector<16x128xf32>
    tpu.vector_store %arg3[%c0_7, %c0_8], %40 {strides = array<i32>} : memref<16x128xf32, #tpu.memory_space<vmem>>, vector<16x128xf32>,
    return
  }
  func.func @transform_0(%arg0: i32) -> (i32, i32) {
    %c0_i32 = arith.constant 0 : i32
    %c0_i32_0 = arith.constant 0 : i32
    return %arg0, %c0_i32 : i32, i32
  }
  func.func @transform_1(%arg0: i32) -> (i32, i32) {
    %c0_i32 = arith.constant 0 : i32
    %c0_i32_0 = arith.constant 0 : i32
    %c0_i32_1 = arith.constant 0 : i32
    return %c0_i32, %c0_i32_0 : i32, i32
  }
  func.func @transform_2(%arg0: i32) -> (i32, i32) {
    %c0_i32 = arith.constant 0 : i32
    %c0_i32_0 = arith.constant 0 : i32
    return %arg0, %c0_i32 : i32, i32
  }
}

</mosaic_0001>

<llo_original>
// kernel: tpu_custom_call.1
$region0: #{tpu_custom_call.1}
  #allocation0 [shape = 'u32[]', space=smem, size = 0x4, offset = 0x4, fixed_abs, tag = 'smem constant byte address 0x4 - core index']
  #allocation1 [shape = 'u32[144,128]{1,0:T(1,128)}', space=vmem, size = 0x12000, scoped, tag = 'internal scratch']
  %s0 = inlined_call_operand.vmem [shape: f32[16,512], index: 0, kind: input, shape index: {}]
  %s1 = inlined_call_operand.vmem [shape: f32[512,4], index: 1, kind: input, shape index: {}]
  %s2 = inlined_call_operand.hbm [shape: f32[16,128], index: 2, kind: output, shape index: {}]
  %s3 = sld [smem:[#allocation0]]
  $region18: #{tpu_custom_call.1} parent=0
    _
  %s5 = ssub.s32 1, %s3
  %s6 = scalar_select 0, %s5, %s3
  $region1: #{tpu_custom_call.1} parent=0
    #allocation2 [shape = 'u8[8192]{0}', space=vmem, size = 0x2000, scoped, tag = 'output window, operand 0, single buffered']
    #allocation3 [shape = 's32[1]{0}', space=sflag, size = 0x4, scoped, tag = 'scoped memory for tpu_custom_call.1']
    %7 = vsyncpa [#allocation3], 0
    // Predicated region
    $region2: #{tpu_custom_call.1} parent=1 // pred_check
      _
    $region3: #{tpu_custom_call.1} parent=1 // pred_check_branch
      %9 = sbr.rel (0) target = $region5
    $region4: #{tpu_custom_call.1} parent=1 // pred_region
      _
    $region5: #{tpu_custom_call.1} parent=1 // pred_fallthru
      _
    // Predicated region
    $region6: #{tpu_custom_call.1} parent=1 // pred_check
      _
    $region7: #{tpu_custom_call.1} parent=1 // pred_check_branch
      %11 = sbr.rel (0) target = $region9
    $region8: #{tpu_custom_call.1} parent=1 // pred_region
      _
    $region9: #{tpu_custom_call.1} parent=1 // pred_fallthru
      _
    %v12 = vld [vmem:[%s0] sm:$0xff]
    %v13 = vld [vmem:[%s0 + $0x8] sm:$0xff]
    %v14 = vld [vmem:[%s0 + $0x10] sm:$0xff]
    %v15 = vld [vmem:[%s0 + $0x18] sm:$0xff]
    %v16 = vld [vmem:[%s0 + $0x20] sm:$0xff]
    %v17 = vld [vmem:[%s0 + $0x28] sm:$0xff]
    %v18 = vld [vmem:[%s0 + $0x30] sm:$0xff]
    %v19 = vld [vmem:[%s0 + $0x38] sm:$0xff]
    %v20 = vmul.f32 %v12, %v12
    %v21 = vmul.f32 %v13, %v13
    %v22 = vmul.f32 %v14, %v14
    %v23 = vmul.f32 %v15, %v15
    %v24 = vmul.f32 %v16, %v16
    %v25 = vmul.f32 %v17, %v17
    %v26 = vmul.f32 %v18, %v18
    %v27 = vmul.f32 %v19, %v19
    %v28 = vadd.f32 %v20, %v21
    %v29 = vadd.f32 %v28, %v22
    %v30 = vadd.f32 %v29, %v23
    %31 = vadd.xlane.f32.xlu0 %v30
    %v32 = vpop.xlane.xlu0 %31
    %v33 = vadd.f32 %v24, %v25
    %v34 = vadd.f32 %v33, %v26
    %v35 = vadd.f32 %v34, %v27
    %36 = vadd.xlane.f32.xlu0 %v35
    %v37 = vpop.xlane.xlu0 %36
    %v38 = vadd.f32 %v32, 1e-12
    %v39 = vadd.f32 %v37, 1e-12
    %v40 = vrsqrt.pop %v38
    %v41 = vrsqrt.pop %v39
    %v42 = vld [vmem:[%s1] sm:$0xff]
    %v43 = vld [vmem:[%s1 + $0x8] sm:$0xff]
    %v44 = vld [vmem:[%s1 + $0x10] sm:$0xff]
    %v45 = vld [vmem:[%s1 + $0x18] sm:$0xff]
    %v46 = vld [vmem:[%s1 + $0x20] sm:$0xff]
    %v47 = vld [vmem:[%s1 + $0x28] sm:$0xff]
    %v48 = vld [vmem:[%s1 + $0x30] sm:$0xff]
    %v49 = vld [vmem:[%s1 + $0x38] sm:$0xff]
    %v50 = vld [vmem:[%s1 + $0x40] sm:$0xff]
    %v51 = vld [vmem:[%s1 + $0x48] sm:$0xff]
    %v52 = vld [vmem:[%s1 + $0x50] sm:$0xff]
    %v53 = vld [vmem:[%s1 + $0x58] sm:$0xff]
    %v54 = vld [vmem:[%s1 + $0x60] sm:$0xff]
    %v55 = vld [vmem:[%s1 + $0x68] sm:$0xff]
    %v56 = vld [vmem:[%s1 + $0x70] sm:$0xff]
    %v57 = vld [vmem:[%s1 + $0x78] sm:$0xff]
    %v58 = vld [vmem:[%s1 + $0x80] sm:$0xff]
    %v59 = vld [vmem:[%s1 + $0x88] sm:$0xff]
    %v60 = vld [vmem:[%s1 + $0x90] sm:$0xff]
    %v61 = vld [vmem:[%s1 + $0x98] sm:$0xff]
    %v62 = vld [vmem:[%s1 + $0xa0] sm:$0xff]
    %v63 = vld [vmem:[%s1 + $0xa8] sm:$0xff]
    %v64 = vld [vmem:[%s1 + $0xb0] sm:$0xff]
    %v65 = vld [vmem:[%s1 + $0xb8] sm:$0xff]
    %v66 = vld [vmem:[%s1 + $0xc0] sm:$0xff]
    %v67 = vld [vmem:[%s1 + $0xc8] sm:$0xff]
    %v68 = vld [vmem:[%s1 + $0xd0] sm:$0xff]
    %v69 = vld [vmem:[%s1 + $0xd8] sm:$0xff]
    %v70 = vld [vmem:[%s1 + $0xe0] sm:$0xff]
    %v71 = vld [vmem:[%s1 + $0xe8] sm:$0xff]
    %v72 = vld [vmem:[%s1 + $0xf0] sm:$0xff]
    %v73 = vld [vmem:[%s1 + $0xf8] sm:$0xff]
    %v74 = vld [vmem:[%s1 + $0x100] sm:$0xff]
    %v75 = vld [vmem:[%s1 + $0x108] sm:$0xff]
    %v76 = vld [vmem:[%s1 + $0x110] sm:$0xff]
    %v77 = vld [vmem:[%s1 + $0x118] sm:$0xff]
    %v78 = vld [vmem:[%s1 + $0x120] sm:$0xff]
    %v79 = vld [vmem:[%s1 + $0x128] sm:$0xff]
    %v80 = vld [vmem:[%s1 + $0x130] sm:$0xff]
    %v81 = vld [vmem:[%s1 + $0x138] sm:$0xff]
    %v82 = vld [vmem:[%s1 + $0x140] sm:$0xff]
    %v83 = vld [vmem:[%s1 + $0x148] sm:$0xff]
    %v84 = vld [vmem:[%s1 + $0x150] sm:$0xff]
    %v85 = vld [vmem:[%s1 + $0x158] sm:$0xff]
    %v86 = vld [vmem:[%s1 + $0x160] sm:$0xff]
    %v87 = vld [vmem:[%s1 + $0x168] sm:$0xff]
    %v88 = vld [vmem:[%s1 + $0x170] sm:$0xff]
    %v89 = vld [vmem:[%s1 + $0x178] sm:$0xff]
    %v90 = vld [vmem:[%s1 + $0x180] sm:$0xff]
    %v91 = vld [vmem:[%s1 + $0x188] sm:$0xff]
    %v92 = vld [vmem:[%s1 + $0x190] sm:$0xff]
    %v93 = vld [vmem:[%s1 + $0x198] sm:$0xff]
    %v94 = vld [vmem:[%s1 + $0x1a0] sm:$0xff]
    %v95 = vld [vmem:[%s1 + $0x1a8] sm:$0xff]
    %v96 = vld [vmem:[%s1 + $0x1b0] sm:$0xff]
    %v97 = vld [vmem:[%s1 + $0x1b8] sm:$0xff]
    %v98 = vld [vmem:[%s1 + $0x1c0] sm:$0xff]
    %v99 = vld [vmem:[%s1 + $0x1c8] sm:$0xff]
    %v100 = vld [vmem:[%s1 + $0x1d0] sm:$0xff]
    %v101 = vld [vmem:[%s1 + $0x1d8] sm:$0xff]
    %v102 = vld [vmem:[%s1 + $0x1e0] sm:$0xff]
    %v103 = vld [vmem:[%s1 + $0x1e8] sm:$0xff]
    %v104 = vld [vmem:[%s1 + $0x1f0] sm:$0xff]
    %v105 = vld [vmem:[%s1 + $0x1f8] sm:$0xff]
    %106 = vmatprep.subr.mxu0 0.0
    %107 = vmatpush1.msra.mxu0 %v57
    %108 = vmatprep.subr.mxu0 0.0
    %109 = vmatpush1.msra.mxu0 %v56
    %110 = vmatprep.subr.mxu0 0.0
    %111 = vmatpush1.msra.mxu0 %v55
    %112 = vmatprep.subr.mxu0 0.0
    %113 = vmatpush1.msra.mxu0 %v54
    %114 = vmatprep.subr.mxu0 0.0
    %115 = vmatpush1.msra.mxu0 %v53
    %116 = vmatprep.subr.mxu0 0.0
    %117 = vmatpush1.msra.mxu0 %v52
    %118 = vmatprep.subr.mxu0 0.0
    %119 = vmatpush1.msra.mxu0 %v51
    %120 = vmatprep.subr.mxu0 0.0
    %121 = vmatpush1.msra.mxu0 %v50
    %122 = vmatprep.subr.mxu0 0.0
    %123 = vmatpush1.msra.mxu0 %v49
    %124 = vmatprep.subr.mxu0 0.0
    %125 = vmatpush1.msra.mxu0 %v48
    %126 = vmatprep.subr.mxu0 0.0
    %127 = vmatpush1.msra.mxu0 %v47
    %128 = vmatprep.subr.mxu0 0.0
    %129 = vmatpush1.msra.mxu0 %v46
    %130 = vmatprep.subr.mxu0 0.0
    %131 = vmatpush1.msra.mxu0 %v45
    %132 = vmatprep.subr.mxu0 0.0
    %133 = vmatpush1.msra.mxu0 %v44
    %134 = vmatprep.subr.mxu0 0.0
    %135 = vmatpush1.msra.mxu0 %v43
    %136 = vmatprep.subr.mxu0 0.0
    %137 = vmatpush1.msra.mxu0 %v42
    %138 = vmatprep.subr.mxu0 0.0
    %139 = vmatpush2.msra.mxu0 %v73
    %140 = vmatprep.subr.mxu0 0.0
    %141 = vmatpush2.msra.mxu0 %v72
    %142 = vmatprep.subr.mxu0 0.0
    %143 = vmatpush2.msra.mxu0 %v71
    %144 = vmatprep.subr.mxu0 0.0
    %145 = vmatpush2.msra.mxu0 %v70
    %146 = vmatprep.subr.mxu0 0.0
    %147 = vmatpush2.msra.mxu0 %v69
    %148 = vmatprep.subr.mxu0 0.0
    %149 = vmatpush2.msra.mxu0 %v68
    %150 = vmatprep.subr.mxu0 0.0
    %151 = vmatpush2.msra.mxu0 %v67
    %152 = vmatprep.subr.mxu0 0.0
    %153 = vmatpush2.msra.mxu0 %v66
    %154 = vmatprep.subr.mxu0 0.0
    %155 = vmatpush2.msra.mxu0 %v65
    %156 = vmatprep.subr.mxu0 0.0
    %157 = vmatpush2.msra.mxu0 %v64
    %158 = vmatprep.subr.mxu0 0.0
    %159 = vmatpush2.msra.mxu0 %v63
    %160 = vmatprep.subr.mxu0 0.0
    %161 = vmatpush2.msra.mxu0 %v62
    %162 = vmatprep.subr.mxu0 0.0
    %163 = vmatpush2.msra.mxu0 %v61
    %164 = vmatprep.subr.mxu0 0.0
    %165 = vmatpush2.msra.mxu0 %v60
    %166 = vmatprep.subr.mxu0 0.0
    %167 = vmatpush2.msra.mxu0 %v59
    %168 = vmatprep.subr.mxu0 0.0
    %169 = vmatpush2.msra.mxu0 %v58
    %170 = vmatprep.mubr.f32.mxu0 %v13
    %171 = vmatmul.mubr.f32.gmra.mxu0 %v12
    %v172 = vpop.f32.mrf.mxu0
    %v173 = vadd.f32 0.0, %v172
    %v174 = vpop.f32.mrf.mxu0
    %175 = vmatprep.mubr.f32.mxu0 %v17
    %176 = vmatmul.mubr.f32.gmra.mxu0 %v16
    %v177 = vpop.f32.mrf.mxu0
    %v178 = vadd.f32 0.0, %v177
    %v179 = vpop.f32.mrf.mxu0
    %180 = vdwg.mxu0
    %181 = vmatprep.subr.mxu0 0.0
    %182 = vmatpush1.msra.mxu0 %v89
    %183 = vmatprep.subr.mxu0 0.0
    %184 = vmatpush1.msra.mxu0 %v88
    %185 = vmatprep.subr.mxu0 0.0
    %186 = vmatpush1.msra.mxu0 %v87
    %187 = vmatprep.subr.mxu0 0.0
    %188 = vmatpush1.msra.mxu0 %v86
    %189 = vmatprep.subr.mxu0 0.0
    %190 = vmatpush1.msra.mxu0 %v85
    %191 = vmatprep.subr.mxu0 0.0
    %192 = vmatpush1.msra.mxu0 %v84
    %193 = vmatprep.subr.mxu0 0.0
    %194 = vmatpush1.msra.mxu0 %v83
    %195 = vmatprep.subr.mxu0 0.0
    %196 = vmatpush1.msra.mxu0 %v82
    %197 = vmatprep.subr.mxu0 0.0
    %198 = vmatpush1.msra.mxu0 %v81
    %199 = vmatprep.subr.mxu0 0.0
    %200 = vmatpush1.msra.mxu0 %v80
    %201 = vmatprep.subr.mxu0 0.0
    %202 = vmatpush1.msra.mxu0 %v79
    %203 = vmatprep.subr.mxu0 0.0
    %204 = vmatpush1.msra.mxu0 %v78
    %205 = vmatprep.subr.mxu0 0.0
    %206 = vmatpush1.msra.mxu0 %v77
    %207 = vmatprep.subr.mxu0 0.0
    %208 = vmatpush1.msra.mxu0 %v76
    %209 = vmatprep.subr.mxu0 0.0
    %210 = vmatpush1.msra.mxu0 %v75
    %211 = vmatprep.subr.mxu0 0.0
    %212 = vmatpush1.msra.mxu0 %v74
    %213 = vmatprep.subr.mxu0 0.0
    %214 = vmatpush2.msra.mxu0 %v105
    %215 = vmatprep.subr.mxu0 0.0
    %216 = vmatpush2.msra.mxu0 %v104
    %217 = vmatprep.subr.mxu0 0.0
    %218 = vmatpush2.msra.mxu0 %v103
    %219 = vmatprep.subr.mxu0 0.0
    %220 = vmatpush2.msra.mxu0 %v102
    %221 = vmatprep.subr.mxu0 0.0
    %222 = vmatpush2.msra.mxu0 %v101
    %223 = vmatprep.subr.mxu0 0.0
    %224 = vmatpush2.msra.mxu0 %v100
    %225 = vmatprep.subr.mxu0 0.0
    %226 = vmatpush2.msra.mxu0 %v99
    %227 = vmatprep.subr.mxu0 0.0
    %228 = vmatpush2.msra.mxu0 %v98
    %229 = vmatprep.subr.mxu0 0.0
    %230 = vmatpush2.msra.mxu0 %v97
    %231 = vmatprep.subr.mxu0 0.0
    %232 = vmatpush2.msra.mxu0 %v96
    %233 = vmatprep.subr.mxu0 0.0
    %234 = vmatpush2.msra.mxu0 %v95
    %235 = vmatprep.subr.mxu0 0.0
    %236 = vmatpush2.msra.mxu0 %v94
    %237 = vmatprep.subr.mxu0 0.0
    %238 = vmatpush2.msra.mxu0 %v93
    %239 = vmatprep.subr.mxu0 0.0
    %240 = vmatpush2.msra.mxu0 %v92
    %241 = vmatprep.subr.mxu0 0.0
    %242 = vmatpush2.msra.mxu0 %v91
    %243 = vmatprep.subr.mxu0 0.0
    %244 = vmatpush2.msra.mxu0 %v90
    %245 = vmatprep.mubr.f32.mxu0 %v15
    %246 = vmatmul.mubr.f32.gmra.mxu0 %v14
    %v247 = vpop.f32.mrf.mxu0
    %v248 = vadd.f32 %v173, %v247
    %v249 = vpop.f32.mrf.mxu0
    %250 = vmatprep.mubr.f32.mxu0 %v19
    %251 = vmatmul.mubr.f32.gmra.mxu0 %v18
    %v252 = vpop.f32.mrf.mxu0
    %v253 = vadd.f32 %v178, %v252
    %v254 = vpop.f32.mrf.mxu0
    %255 = vdwg.mxu0
    %v256 = vmul.f32 %v248, %v40
    %v257 = vmul.f32 %v253, %v41
    %vm258 = vcmask 31744
    %v259 = vsel %vm258, %v256, -inf
    %260 = vmax.xlane.f32.xlu0 %v259
    %v261 = vpop.xlane.xlu0 %260
    %v262 = vsel %vm258, %v257, -inf
    %263 = vmax.xlane.f32.xlu0 %v262
    %v264 = vpop.xlane.xlu0 %263
    %v265 = vsub.f32 %v256, %v261
    %v266 = vsub.f32 %v257, %v264
    %v267 = vmul.f32 %v265, 1.442695
    %v268 = vpow.pop %v267
    %v269 = vmul.f32 %v266, 1.442695
    %v270 = vpow.pop %v269
    %v271 = vsel %vm258, %v268, 0.0
    %272 = vadd.xlane.f32.xlu0 %v271
    %v273 = vpop.xlane.xlu0 %272
    %v274 = vsel %vm258, %v270, 0.0
    %275 = vadd.xlane.f32.xlu0 %v274
    %v276 = vpop.xlane.xlu0 %275
    %v277 = vrcp.pop %v273
    %v278 = vmul.f32 %v268, %v277
    %v279 = vrcp.pop %v276
    %v280 = vmul.f32 %v270, %v279
    %282 = vset.pattern.permute.xlu0 0
    %283 = vperm.xlu0 %282, %v278
    %v284 = vpop.permute.xlu0 %283
    %287 = vset.pattern.permute.xlu0 0
    %288 = vperm.xlu0 %287, %v280
    %v289 = vpop.permute.xlu0 %288
    %v291 = vmul.f32 %v284, %v12
    %v292 = vmul.f32 %v289, %v16
    %293 = vset.pattern.permute.xlu0 1
    %294 = vperm.xlu0 %293, %v278
    %v295 = vpop.permute.xlu0 %294
    %297 = vset.pattern.permute.xlu0 1
    %298 = vperm.xlu0 %297, %v280
    %v299 = vpop.permute.xlu0 %298
    %v301 = vmul.f32 %v295, %v13
    %v302 = vmul.f32 %v299, %v17
    %v303 = vadd.f32 %v291, %v301
    %v304 = vadd.f32 %v292, %v302
    %305 = vset.pattern.permute.xlu0 2
    %306 = vperm.xlu0 %305, %v278
    %v307 = vpop.permute.xlu0 %306
    %309 = vset.pattern.permute.xlu0 2
    %310 = vperm.xlu0 %309, %v280
    %v311 = vpop.permute.xlu0 %310
    %v313 = vmul.f32 %v307, %v14
    %v314 = vmul.f32 %v311, %v18
    %v315 = vadd.f32 %v303, %v313
    %v316 = vadd.f32 %v304, %v314
    %317 = vset.pattern.permute.xlu0 3
    %318 = vperm.xlu0 %317, %v278
    %v319 = vpop.permute.xlu0 %318
    %321 = vset.pattern.permute.xlu0 3
    %322 = vperm.xlu0 %321, %v280
    %v323 = vpop.permute.xlu0 %322
    %v325 = vmul.f32 %v319, %v15
    %v326 = vmul.f32 %v323, %v19
    %v327 = vadd.f32 %v315, %v325
    %v328 = vadd.f32 %v316, %v326
    %v329 = vmul.f32 %v327, %v40
    %v330 = vmul.f32 %v328, %v41
    %331 = vst [vmem:[#allocation2] sm:$0xff] %v329
    %332 = vst [vmem:[#allocation2 + $0x8] sm:$0xff] %v330
    // Predicated region
    $region10: #{tpu_custom_call.1} parent=1 // pred_check
      _
    $region11: #{tpu_custom_call.1} parent=1 // pred_check_branch
      %334 = sbr.rel (0) target = $region13
    $region12: #{tpu_custom_call.1} parent=1 // pred_region
      %s336 = ssub.s32 256, 256
      %337 = vsyncadd [#allocation3], %s336
      %s338 = sshll.u32 [#allocation2], 4
      %s339 = int_to_ptr.vmem [resolvable:$true] %s338
      %344 = dma.vmem_to_hbm [thread:$0]  %s339, 256, %s2, [#allocation3], 128, 128, 8
    $region13: #{tpu_custom_call.1} parent=1 // pred_fallthru
      _
    // Predicated region
    $region14: #{tpu_custom_call.1} parent=1 // pred_check
      _
    $region15: #{tpu_custom_call.1} parent=1 // pred_check_branch
      %346 = sbr.rel (0) target = $region17
    $region16: #{tpu_custom_call.1} parent=1 // pred_region
      %347 = dma.done [#allocation3], 256
    $region17: #{tpu_custom_call.1} parent=1 // pred_fallthru
      _
    %348 = vsyncpa [#allocation3], 1

</llo_original>
